<compile_context>
chip_gen: v7x
topology: tpu7x:2x2x1
jax: 0.10.0
libtpu: 0.0.40
codegen_flags: <defaults>
</compile_context>

<pallas_src>
import functools
import math

import jax
import jax.numpy as jnp
import numpy as np
from jax.experimental import pallas as pl
from jax.experimental.pallas import tpu as pltpu


# ---------------------------------------------------------------------------
# Kernel bodies
# ---------------------------------------------------------------------------

def _adain_lrelu_kernel(x_ref, g_ref, b_ref, o_ref, *, eps, slope):
    """Fused per-row instance norm + affine + LeakyReLU on a (RB, HW) slab."""
    x = x_ref[...]                                        # (RB, HW)
    hw = x.shape[-1]
    mean = jnp.sum(x, axis=-1, keepdims=True) * (1.0 / hw)
    xc = x - mean
    # torch.Tensor.std default is unbiased (divide by HW - 1).
    var = jnp.sum(xc * xc, axis=-1, keepdims=True) * (1.0 / (hw - 1))
    y = xc / (jnp.sqrt(var) + eps) * g_ref[...] + b_ref[...]
    o_ref[...] = jnp.where(y >= 0.0, y, slope * y).astype(o_ref.dtype)


def _conv3x3_kernel(*refs, spatial_w, out_scale, with_residual):
    """3x3 pad-1 conv for one batch element (channels on sublanes, HW on lanes).

    x_ref : (1, C_in, HW)   w_ref : (9, C_out, C_in)   b_ref : (C_out, 1)
    m_ref : (9, 1, HW) tap-validity masks (zero padding at the borders)
    r_ref : (1, C_out, HW) optional residual           o_ref : (1, C_out, HW)
    """
    if with_residual:
        x_ref, w_ref, b_ref, m_ref, r_ref, o_ref = refs
    else:
        x_ref, w_ref, b_ref, m_ref, o_ref = refs
        r_ref = None

    x = x_ref[0]                                          # (C_in, HW)
    hw = x.shape[-1]
    cout = w_ref.shape[1]
    acc = jnp.zeros((cout, hw), jnp.float32)

    for t in range(9):                                    # static, unrolled
        oh, ow = t // 3 - 1, t % 3 - 1
        off = oh * spatial_w + ow                         # flat spatial offset
        xs = x if off == 0 else pltpu.roll(x, shift=(-off) % hw, axis=1)
        xs = xs * m_ref[t]                                # (C_in,HW) * (1,HW)
        acc = acc + jnp.dot(w_ref[t], xs,
                            preferred_element_type=jnp.float32,
                            precision=jax.lax.Precision.HIGHEST)

    acc = acc + b_ref[...]                                # (C_out, 1) broadcast
    if with_residual:
        acc = (acc + r_ref[0]) * out_scale
    o_ref[0] = acc.astype(o_ref.dtype)


def _conv1x1_kernel(x_ref, w_ref, o_ref):
    """Shortcut 1x1 conv (no bias): (C_out,C_in) @ (C_in,HW)."""
    o_ref[0] = jnp.dot(w_ref[...], x_ref[0],
                       preferred_element_type=jnp.float32,
                       precision=jax.lax.Precision.HIGHEST).astype(o_ref.dtype)


# ---------------------------------------------------------------------------
# Wrappers
# ---------------------------------------------------------------------------

def adain_lrelu(x, gamma, beta, *, eps=1e-5, slope=0.2):
    n, c, h, w = x.shape
    hw, nc = h * w, n * c
    x2 = x.reshape(nc, hw)                                # lane-dense slab
    g2 = jnp.tile(gamma.reshape(1, c), (n, 1)).reshape(nc, 1).astype(x.dtype)
    b2 = jnp.tile(beta.reshape(1, c), (n, 1)).reshape(nc, 1).astype(x.dtype)
    rb = min(nc, 256) if nc % 8 == 0 else nc              # rows per block
    out = pl.pallas_call(
        functools.partial(_adain_lrelu_kernel, eps=eps, slope=slope),
        out_shape=jax.ShapeDtypeStruct((nc, hw), x.dtype),
        grid_spec=pl.GridSpec(
            grid=(pl.cdiv(nc, rb),),
            in_specs=[pl.BlockSpec((rb, hw), lambda i: (i, 0)),
                      pl.BlockSpec((rb, 1), lambda i: (i, 0)),
                      pl.BlockSpec((rb, 1), lambda i: (i, 0))],
            out_specs=pl.BlockSpec((rb, hw), lambda i: (i, 0))),
        compiler_params=pltpu.CompilerParams(dimension_semantics=("parallel",)),
    )(x2, g2, b2)
    return out.reshape(n, c, h, w)


def conv3x3(x, w, b, *, residual=None, out_scale=1.0):
    n, cin, h, wd = x.shape
    cout = w.shape[0]
    hw = h * wd
    x3 = x.reshape(n, cin, hw)
    w9 = jnp.transpose(w, (2, 3, 0, 1)).reshape(9, cout, cin)  # tap-major
    b2 = b.reshape(cout, 1)

    # Tap-validity masks for the zero-padded borders (trace-time constants).
    hh = np.arange(h).reshape(h, 1)
    ww = np.arange(wd).reshape(1, wd)
    masks = np.empty((9, 1, hw), np.float32)
    for t in range(9):
        oh, ow = t // 3 - 1, t % 3 - 1
        valid = ((hh + oh >= 0) & (hh + oh < h) &
                 (ww + ow >= 0) & (ww + ow < wd))
        masks[t, 0] = valid.reshape(-1).astype(np.float32)
    masks = jnp.asarray(masks, dtype=x.dtype)

    with_residual = residual is not None
    inputs = [x3, w9, b2, masks]
    in_specs = [
        pl.BlockSpec((1, cin, hw), lambda i: (i, 0, 0)),
        pl.BlockSpec((9, cout, cin), lambda i: (0, 0, 0)),
        pl.BlockSpec((cout, 1), lambda i: (0, 0)),
        pl.BlockSpec((9, 1, hw), lambda i: (0, 0, 0)),
    ]
    if with_residual:
        inputs.append(residual.reshape(n, cout, hw))
        in_specs.append(pl.BlockSpec((1, cout, hw), lambda i: (i, 0, 0)))

    out = pl.pallas_call(
        functools.partial(_conv3x3_kernel, spatial_w=wd,
                          out_scale=out_scale, with_residual=with_residual),
        out_shape=jax.ShapeDtypeStruct((n, cout, hw), x.dtype),
        grid_spec=pl.GridSpec(
            grid=(n,),
            in_specs=in_specs,
            out_specs=pl.BlockSpec((1, cout, hw), lambda i: (i, 0, 0))),
        compiler_params=pltpu.CompilerParams(dimension_semantics=("parallel",)),
    )(*inputs)
    return out.reshape(n, cout, h, wd)


def conv1x1(x, w):
    n, cin, h, wd = x.shape
    cout = w.shape[0]
    hw = h * wd
    x3 = x.reshape(n, cin, hw)
    w2 = w.reshape(cout, cin)
    out = pl.pallas_call(
        _conv1x1_kernel,
        out_shape=jax.ShapeDtypeStruct((n, cout, hw), x.dtype),
        grid_spec=pl.GridSpec(
            grid=(n,),
            in_specs=[pl.BlockSpec((1, cin, hw), lambda i: (i, 0, 0)),
                      pl.BlockSpec((cout, cin), lambda i: (0, 0))],
            out_specs=pl.BlockSpec((1, cout, hw), lambda i: (i, 0, 0))),
        compiler_params=pltpu.CompilerParams(dimension_semantics=("parallel",)),
    )(x3, w2)
    return out.reshape(n, cout, h, wd)


def upsample2x_nearest(x):
    # Pure data movement (matches F.interpolate scale_factor=2, mode='nearest').
    return jnp.repeat(jnp.repeat(x, 2, axis=2), 2, axis=3)


def up_block_adain(x, params, *, eps=1e-5, slope=0.2):
    residual = upsample2x_nearest(conv1x1(x, params["w_sc"]))
    out = adain_lrelu(x, params["gamma1"], params["beta1"], eps=eps, slope=slope)
    out = upsample2x_nearest(out)
    out = conv3x3(out, params["w1"], params["b1"])
    out = adain_lrelu(out, params["gamma2"], params["beta2"], eps=eps, slope=slope)
    out = conv3x3(out, params["w2"], params["b2"],
                  residual=residual, out_scale=1.0 / math.sqrt(2))
    return out


# ---------------------------------------------------------------------------
# Pure-JAX reference (mirrors the PyTorch forward)
# ---------------------------------------------------------------------------

def _ref_up_block_adain(x, p, *, eps=1e-5, slope=0.2):
    def adain(t, g, b):
        n, c, h, w = t.shape
        tf = t.reshape(n, c, h * w)
        mean = tf.mean(-1, keepdims=True)
        std = jnp.std(tf, axis=-1, keepdims=True, ddof=1)
        out = (tf - mean) / (std + eps) * g.reshape(1, c, 1) + b.reshape(1, c, 1)
        return out.reshape(n, c, h, w)

    def lrelu(t):
        return jnp.where(t >= 0.0, t, slope * t)

    def up(t):
        return jnp.repeat(jnp.repeat(t, 2, axis=2), 2, axis=3)

    def conv(t, w, b=None, pad=1):
        out = jax.lax.conv_general_dilated(
            t, w, (1, 1), ((pad, pad), (pad, pad)),
            dimension_numbers=("NCHW", "OIHW", "NCHW"),
            precision=jax.lax.Precision.HIGHEST)
        if b is not None:
            out = out + b.reshape(1, -1, 1, 1)
        return out

    residual = up(conv(x, p["w_sc"], pad=0))
    out = conv(up(lrelu(adain(x, p["gamma1"], p["beta1"]))), p["w1"], p["b1"])
    out = conv(lrelu(adain(out, p["gamma2"], p["beta2"])), p["w2"], p["b2"])
    return (residual + out) / math.sqrt(2)


# ---------------------------------------------------------------------------
# Self-test
# ---------------------------------------------------------------------------

if __name__ == "__main__":
    key = jax.random.PRNGKey(0)
    ks = jax.random.split(key, 10)
    N, C_IN, C_OUT, H, W = 2, 4, 4, 16, 16

    x = jax.random.normal(ks[0], (N, C_IN, H, W), jnp.float32)
    params = {
        "w1": jax.random.normal(ks[1], (C_OUT, C_IN, 3, 3), jnp.float32) * 0.2,
        "b1": jax.random.normal(ks[2], (C_OUT,), jnp.float32) * 0.1,
        "w2": jax.random.normal(ks[3], (C_OUT, C_OUT, 3, 3), jnp.float32) * 0.2,
        "b2": jax.random.normal(ks[4], (C_OUT,), jnp.float32) * 0.1,
        "w_sc": jax.random.normal(ks[5], (C_OUT, C_IN, 1, 1), jnp.float32) * 0.2,
        "gamma1": jax.random.normal(ks[6], (C_IN,), jnp.float32) * 0.2 + 1.0,
        "beta1": jax.random.normal(ks[7], (C_IN,), jnp.float32) * 0.1,
        "gamma2": jax.random.normal(ks[8], (C_OUT,), jnp.float32) * 0.2 + 1.0,
        "beta2": jax.random.normal(ks[9], (C_OUT,), jnp.float32) * 0.1,
    }

    out = up_block_adain(x, params)
    out = jax.block_until_ready(out)

    ref = _ref_up_block_adain(x, params)
    assert out.shape == (N, C_OUT, 2 * H, 2 * W), out.shape
    assert out.dtype == x.dtype
    max_err = float(jnp.max(jnp.abs(out - ref)))
    assert jnp.allclose(out, ref, atol=2e-3, rtol=2e-3), f"max abs err {max_err}"

    print("KERNEL_OK")
</pallas_src>

<mosaic_0001>
module attributes {stable_mosaic.version = 11 : i64} {
  func.func @_conv1x1_kernel(%arg0: i32, %arg1: memref<1x4x256xf32, #tpu.memory_space<vmem>>, %arg2: memref<4x4xf32, #tpu.memory_space<vmem>>, %arg3: memref<1x4x256xf32, #tpu.memory_space<vmem>>) attributes {dimension_semantics = [#tpu.dimension_semantics<parallel>], iteration_bounds = array<i64: 2>, scalar_prefetch = 0 : i64, scratch_operands = 0 : i64, tpu.core_type = #tpu.core_type<tc>, window_params = [{transform_indices = @transform_0, window_bounds = array<i64: 1, 4, 256>}, {pipeline_mode = #tpu.pipeline_mode<synchronous>, transform_indices = @transform_1, window_bounds = array<i64: 4, 4>}, {transform_indices = @transform_2, window_bounds = array<i64: 1, 4, 256>}]} {
    %c0 = arith.constant 0 : index
    %c0_0 = arith.constant 0 : index
    %0 = vector.load %arg2[%c0, %c0_0] : memref<4x4xf32, #tpu.memory_space<vmem>>, vector<4x4xf32>
    %c0_1 = arith.constant 0 : index
    %c0_2 = arith.constant 0 : index
    %c0_3 = arith.constant 0 : index
    %1 = vector.load %arg1[%c0_1, %c0_2, %c0_3] : memref<1x4x256xf32, #tpu.memory_space<vmem>>, vector<1x4x256xf32>
    %2 = vector.shape_cast %1 : vector<1x4x256xf32> to vector<4x256xf32>
    %cst = arith.constant dense<0.000000e+00> : vector<4x256xf32>
    %3 = tpu.matmul %0, %2, %cst {dimension_numbers = #tpu.dot_dimension_numbers<[1], [0], [0], [1], [0, 0, 1, 1], [], []>, precision = #tpu.contract_precision<fp32>} : vector<4x4xf32>, vector<4x256xf32>, vector<4x256xf32> -> vector<4x256xf32>
    %c0_4 = arith.constant 0 : index
    %c0_5 = arith.constant 0 : index
    %c0_6 = arith.constant 0 : index
    %4 = vector.load %arg3[%c0_4, %c0_5, %c0_6] : memref<1x4x256xf32, #tpu.memory_space<vmem>>, vector<1x4x256xf32>
    %5 = vector.shape_cast %4 : vector<1x4x256xf32> to vector<4x256xf32>
    %6 = vector.shape_cast %3 : vector<4x256xf32> to vector<1x4x256xf32>
    tpu.vector_store %arg3[%c0_4, %c0_5, %c0_6], %6 {strides = array<i32>} : memref<1x4x256xf32, #tpu.memory_space<vmem>>, vector<1x4x256xf32>,
    return
  }
  func.func @transform_0(%arg0: i32) -> (i32, i32, i32) {
    %c0_i32 = arith.constant 0 : i32
    %c0_i32_0 = arith.constant 0 : i32
    %c0_i32_1 = arith.constant 0 : i32
    return %arg0, %c0_i32, %c0_i32_0 : i32, i32, i32
  }
  func.func @transform_1(%arg0: i32) -> (i32, i32) {
    %c0_i32 = arith.constant 0 : i32
    %c0_i32_0 = arith.constant 0 : i32
    %c0_i32_1 = arith.constant 0 : i32
    return %c0_i32, %c0_i32_0 : i32, i32
  }
  func.func @transform_2(%arg0: i32) -> (i32, i32, i32) {
    %c0_i32 = arith.constant 0 : i32
    %c0_i32_0 = arith.constant 0 : i32
    %c0_i32_1 = arith.constant 0 : i32
    return %arg0, %c0_i32, %c0_i32_0 : i32, i32, i32
  }
}

</mosaic_0001>

<llo_original>
// kernel: tpu_custom_call.1
$region0: #{tpu_custom_call.1}
  #allocation0 [shape = 'u32[]', space=smem, size = 0x4, offset = 0x4, fixed_abs, tag = 'smem constant byte address 0x4 - core index']
  #allocation1 [shape = 'u32[144,128]{1,0:T(1,128)}', space=vmem, size = 0x12000, scoped, tag = 'internal scratch']
  %s0 = inlined_call_operand.hbm [shape: f32[2,4,256], index: 0, kind: input, shape index: {}]
  %s1 = inlined_call_operand.hbm [shape: f32[4,4], index: 1, kind: input, shape index: {}]
  %s2 = inlined_call_operand.hbm [shape: f32[2,4,256], index: 2, kind: output, shape index: {}]
  %s3 = sld [smem:[#allocation0]]
  $region49: #{tpu_custom_call.1} parent=0
    _
  %s5 = ssub.s32 1, %s3
  %s6 = scalar_select 0, %s5, %s3
  $region1: #{tpu_custom_call.1} parent=0
    #allocation2 [shape = 'u8[8192]{0}', space=vmem, size = 0x2000, scoped, tag = 'input window, operand 0']
    #allocation3 [shape = 's32[2]{0}', space=sflag, size = 0x8, scoped, tag = 'scoped memory for tpu_custom_call.1']
    #allocation4 [shape = 's32[2]{0}', space=sflag, size = 0x8, scoped, tag = 'scoped memory for tpu_custom_call.1']
    #allocation5 [shape = 'u8[2048]{0}', space=vmem, size = 0x800, scoped, tag = 'input window, operand 1, single buffered']
    #allocation6 [shape = 's32[1]{0}', space=sflag, size = 0x4, scoped, tag = 'scoped memory for tpu_custom_call.1']
    #allocation7 [shape = 'u8[8192]{0}', space=vmem, size = 0x2000, scoped, tag = 'output window, operand 0']
    %7 = vsyncpa [#allocation3], 0
    %s8 = scalar_lea.sflag [#allocation3], 1
    %9 = vsyncpa %s8, 0
    %10 = vsyncpa [#allocation6], 0
    %11 = vsyncpa [#allocation4], 0
    %s12 = scalar_lea.sflag [#allocation4], 1
    %13 = vsyncpa %s12, 0
    loop: start=0, step=1, limit=4
    $region2: #{tpu_custom_call.1} parent=1 // loop_pre_header
      _
    $region3: #{tpu_custom_call.1} parent=1 // loop_header
      %s15 = sphi 0, %s19
      %p16 = scmp.ge.s32.totalorder %s15, 4
      %s25 = sphi 0, %s27
      %s28 = sphi 0, %s25
      %s29 = sphi 0, %s28
      %s45 = sphi 0, %s29
      %s49 = sphi 0, %s49
      %s51 = sphi 0, %s49
      %s52 = sphi 0, %s51
      %s66 = sphi 0, %s52
      %s72 = sphi 0, %s74
      %s75 = sphi 0, %s72
      %s76 = sphi 0, %s75
      %s92 = sphi 0, %s76
    $region4: #{tpu_custom_call.1} parent=1 // loop_header_branch
      %18 = sbr.rel (%p16) target = $region8
    $region5: #{tpu_custom_call.1} parent=1 // loop_body
      %s20 = ssub.s32 %s15, 1
      %s21 = ssub.s32 %s15, 2
      %s22 = sadd.s32 %s15, 1
      %s23 = ssub.s32 %s15, %s22
      %p24 = scmp.eq.s32.totalorder %s23, 0
      %s26 = sadd.s32 %s25, 1
      %s27 = scalar_select %p24, %s25, %s26
      %p30 = pneg %p24
      %p31 = scmp.eq.s32.totalorder %s15, 1
      %p32 = por %p30, %p31
      %p33 = scmp.ne.s32.totalorder %s25, %s28
      %p34 = scmp.eq.s32.totalorder %s15, 0
      %p35 = por %p33, %p34
      %p36 = scmp.ne.s32.totalorder %s25, %s28
      %p37 = scmp.eq.s32.totalorder %s20, 1
      %p38 = por %p36, %p37
      %p39 = scmp.ne.s32.totalorder %s28, %s29
      %p40 = scmp.eq.s32.totalorder %s20, 0
      %p41 = por %p39, %p40
      %p42 = scmp.ne.s32.totalorder %s28, %s29
      %p43 = scmp.eq.s32.totalorder %s21, 1
      %p44 = por %p42, %p43
      %p46 = scmp.ne.s32.totalorder %s29, %s45
      %p47 = scmp.eq.s32.totalorder %s21, 0
      %p48 = por %p46, %p47
      %s50 = sadd.s32 %s49, 1
      %p53 = scmp.eq.s32.totalorder %s15, 1
      %p54 = scmp.ne.s32.totalorder %s49, %s51
      %p55 = scmp.eq.s32.totalorder %s15, 0
      %p56 = por %p54, %p55
      %p57 = scmp.ne.s32.totalorder %s49, %s51
      %p58 = scmp.eq.s32.totalorder %s20, 1
      %p59 = por %p57, %p58
      %p60 = scmp.ne.s32.totalorder %s51, %s52
      %p61 = scmp.eq.s32.totalorder %s20, 0
      %p62 = por %p60, %p61
      %p63 = scmp.ne.s32.totalorder %s51, %s52
      %p64 = scmp.eq.s32.totalorder %s21, 1
      %p65 = por %p63, %p64
      %p67 = scmp.ne.s32.totalorder %s52, %s66
      %p68 = scmp.eq.s32.totalorder %s21, 0
      %p69 = por %p67, %p68
      %s70 = ssub.s32 %s15, %s22
      %p71 = scmp.eq.s32.totalorder %s70, 0
      %s73 = sadd.s32 %s72, 1
      %s74 = scalar_select %p71, %s72, %s73
      %p77 = pneg %p71
      %p78 = scmp.eq.s32.totalorder %s15, 1
      %p79 = por %p77, %p78
      %p80 = scmp.ne.s32.totalorder %s72, %s75
      %p81 = scmp.eq.s32.totalorder %s15, 0
      %p82 = por %p80, %p81
      %p83 = scmp.ne.s32.totalorder %s72, %s75
      %p84 = scmp.eq.s32.totalorder %s20, 1
      %p85 = por %p83, %p84
      %p86 = scmp.ne.s32.totalorder %s75, %s76
      %p87 = scmp.eq.s32.totalorder %s20, 0
      %p88 = por %p86, %p87
      %p89 = scmp.ne.s32.totalorder %s75, %s76
      %p90 = scmp.eq.s32.totalorder %s21, 1
      %p91 = por %p89, %p90
      %p93 = scmp.ne.s32.totalorder %s76, %s92
      %p94 = scmp.eq.s32.totalorder %s21, 0
      %p95 = por %p93, %p94
      %p96 = scmp.le.s32.totalorder 1, %s15
      %p97 = scmp.lt.s32.totalorder %s15, 3
      %p98 = pnand %p96, %p97
      %p99 = pneg %p98
      // Predicated region
      $region9: #{tpu_custom_call.1} parent=5 // pred_check
        _
      $region10: #{tpu_custom_call.1} parent=5 // pred_check_branch
        %101 = sbr.rel (%p98) target = $region12
      $region11: #{tpu_custom_call.1} parent=5 // pred_region
        %s102 = ssub.s32 %s15, 1
        // Predicated region
        $region13: #{tpu_custom_call.1} parent=11 // pred_check
          %p103 = pneg %p62
        $region14: #{tpu_custom_call.1} parent=11 // pred_check_branch
          %105 = sbr.rel (%p103) target = $region16
        $region15: #{tpu_custom_call.1} parent=11 // pred_region
          %s107 = ssub.s32 64, 64
          %108 = vsyncadd [#allocation6], %s107
          %s110 = sshll.u32 [#allocation5], 4
          %s111 = int_to_ptr.vmem [resolvable:$true] %s110
          %113 = dma.hbm_to_vmem [thread:$0]  %s1, 64, %s111, [#allocation6]
        $region16: #{tpu_custom_call.1} parent=11 // pred_fallthru
          _
      $region12: #{tpu_custom_call.1} parent=5 // pred_fallthru
        _
      %p114 = scmp.lt.s32.totalorder %s15, 2
      // Predicated region
      $region17: #{tpu_custom_call.1} parent=5 // pred_check
        %p115 = pneg %p114
      $region18: #{tpu_custom_call.1} parent=5 // pred_check_branch
        %117 = sbr.rel (%p115) target = $region20
      $region19: #{tpu_custom_call.1} parent=5 // pred_region
        // Predicated region
        $region21: #{tpu_custom_call.1} parent=19 // pred_check
          %p118 = pneg %p35
        $region22: #{tpu_custom_call.1} parent=19 // pred_check_branch
          %120 = sbr.rel (%p118) target = $region24
        $region23: #{tpu_custom_call.1} parent=19 // pred_region
          %s121 = sand.u32 %s25, 1
          %s122 = scalar_lea.sflag [#allocation3], %s121
          %s123 = sand.u32 %s25, 1
          %s124 = smul.addr %s123, 8
          %s125 = scalar_lea.vmem [#allocation2], %s124
          %s127 = ssub.s32 128, 128
          %128 = vsyncadd %s122, %s127
          %s129 = smul.addr %s15, 2
          %s130 = smul.addr %s129, 64
          %s131 = scalar_lea.hbm %s0, %s130
          %s133 = sshll.u32 %s125, 4
          %s134 = int_to_ptr.vmem [resolvable:$true] %s133
          %136 = dma.hbm_to_vmem [thread:$0]  %s131, 128, %s134, %s122
        $region24: #{tpu_custom_call.1} parent=19 // pred_fallthru
          _
      $region20: #{tpu_custom_call.1} parent=5 // pred_fallthru
        _
      %p137 = scmp.le.s32.totalorder 1, %s15
      %p138 = scmp.lt.s32.totalorder %s15, 3
      %p139 = pnand %p137, %p138
      %p140 = pneg %p139
      // Predicated region
      $region25: #{tpu_custom_call.1} parent=5 // pred_check
        _
      $region26: #{tpu_custom_call.1} parent=5 // pred_check_branch
        %142 = sbr.rel (%p139) target = $region28
      $region27: #{tpu_custom_call.1} parent=5 // pred_region
        %s143 = ssub.s32 %s15, 1
        %s144 = sand.u32 %s28, 1
        %s145 = scalar_lea.sflag [#allocation3], %s144
        %s146 = sand.u32 %s28, 1
        %s147 = smul.addr %s146, 8
        %s148 = scalar_lea.vmem [#allocation2], %s147
        // Predicated region
        $region29: #{tpu_custom_call.1} parent=27 // pred_check
          %p149 = pneg %p41
        $region30: #{tpu_custom_call.1} parent=27 // pred_check_branch
          %151 = sbr.rel (%p149) target = $region32
        $region31: #{tpu_custom_call.1} parent=27 // pred_region
          %152 = dma.done %s145, 128
        $region32: #{tpu_custom_call.1} parent=27 // pred_fallthru
          _
        // Predicated region
        $region33: #{tpu_custom_call.1} parent=27 // pred_check
          %p153 = pneg %p62
        $region34: #{tpu_custom_call.1} parent=27 // pred_check_branch
          %155 = sbr.rel (%p153) target = $region36
        $region35: #{tpu_custom_call.1} parent=27 // pred_region
          %156 = dma.done [#allocation6], 64
        $region36: #{tpu_custom_call.1} parent=27 // pred_fallthru
          _
        %s157 = sand.u32 %s28, 1
        %s158 = scalar_lea.sflag [#allocation3], %s157
        %s159 = sand.u32 %s28, 1
        %s160 = smul.addr %s159, 8
        %s161 = scalar_lea.vmem [#allocation2], %s160
        %p162 = pneg %p41
        %p163 = pneg %p38
        %p164 = pneg %p62
        %p165 = pneg %p59
        %p166 = pneg %p88
        %p167 = pneg %p85
        %s168 = sand.u32 %s75, 1
        %s169 = scalar_lea.sflag [#allocation4], %s168
        %s170 = sand.u32 %s75, 1
        %s171 = smul.addr %s170, 8
        %s172 = scalar_lea.vmem [#allocation7], %s171
        %v173 = vld [vmem:[#allocation5] sm:$0xf]
        %v174 = vld [vmem:[%s148] sm:$0xff]
        %v176 = vcombine.high %v174, %v174
        %vm177 = vcmask 31744
        %v179 = vsel %vm177, %v173, 0
        %vm181 = vcmask 1043456
        %v182 = vsel %vm181, %v174, 0
        %v184 = vsel %vm181, %v176, 0
        %v186 = vand.u32 %v184, 4294901760
        %187 = vmatprep.subr.mxu0 %v186
        %v188 = vand.u32 %v182, 4294901760
        %189 = vmatpush1.msra.mxu0 %v188
        %190 = vmatprep.subr.mxu0 0.0
        %191 = vmatpush1.msra.mxu0 0.0
        %192 = vmatprep.subr.mxu0 0.0
        %193 = vmatpush1.msra.mxu0 0.0
        %194 = vmatprep.subr.mxu0 0.0
        %195 = vmatpush1.msra.mxu0 0.0
        %196 = vmatprep.subr.mxu0 0.0
        %197 = vmatpush1.msra.mxu0 0.0
        %198 = vmatprep.subr.mxu0 0.0
        %199 = vmatpush1.msra.mxu0 0.0
        %200 = vmatprep.subr.mxu0 0.0
        %201 = vmatpush1.msra.mxu0 0.0
        %202 = vmatprep.subr.mxu0 0.0
        %203 = vmatpush1.msra.mxu0 0.0
        %204 = vmatprep.subr.mxu0 0.0
        %205 = vmatpush1.msra.mxu0 0.0
        %206 = vmatprep.subr.mxu0 0.0
        %207 = vmatpush1.msra.mxu0 0.0
        %208 = vmatprep.subr.mxu0 0.0
        %209 = vmatpush1.msra.mxu0 0.0
        %210 = vmatprep.subr.mxu0 0.0
        %211 = vmatpush1.msra.mxu0 0.0
        %212 = vmatprep.subr.mxu0 0.0
        %213 = vmatpush1.msra.mxu0 0.0
        %214 = vmatprep.subr.mxu0 0.0
        %215 = vmatpush1.msra.mxu0 0.0
        %216 = vmatprep.subr.mxu0 0.0
        %217 = vmatpush1.msra.mxu0 0.0
        %218 = vmatprep.subr.mxu0 0.0
        %219 = vmatpush1.msra.mxu0 0.0
        %220 = vmatprep.subr.mxu0 0.0
        %221 = vmatpush1.msra.mxu0 0.0
        %222 = vmatprep.subr.mxu0 0.0
        %223 = vmatpush1.msra.mxu0 0.0
        %224 = vmatprep.subr.mxu0 0.0
        %225 = vmatpush1.msra.mxu0 0.0
        %226 = vmatprep.subr.mxu0 0.0
        %227 = vmatpush1.msra.mxu0 0.0
        %228 = vmatprep.subr.mxu0 0.0
        %229 = vmatpush1.msra.mxu0 0.0
        %230 = vmatprep.subr.mxu0 0.0
        %231 = vmatpush1.msra.mxu0 0.0
        %232 = vmatprep.subr.mxu0 0.0
        %233 = vmatpush1.msra.mxu0 0.0
        %234 = vmatprep.subr.mxu0 0.0
        %235 = vmatpush1.msra.mxu0 0.0
        %236 = vmatprep.subr.mxu0 0.0
        %237 = vmatpush1.msra.mxu0 0.0
        %238 = vmatprep.subr.mxu0 0.0
        %239 = vmatpush1.msra.mxu0 0.0
        %240 = vmatprep.subr.mxu0 0.0
        %241 = vmatpush1.msra.mxu0 0.0
        %242 = vmatprep.subr.mxu0 0.0
        %243 = vmatpush1.msra.mxu0 0.0
        %244 = vmatprep.subr.mxu0 0.0
        %245 = vmatpush1.msra.mxu0 0.0
        %246 = vmatprep.subr.mxu0 0.0
        %247 = vmatpush1.msra.mxu0 0.0
        %248 = vmatprep.subr.mxu0 0.0
        %249 = vmatpush1.msra.mxu0 0.0
        %250 = vmatprep.subr.mxu0 0.0
        %251 = vmatpush1.msra.mxu0 0.0
        %252 = vmatprep.mubr.f32.mxu0 0.0
        %v253 = vand.u32 %v179, 4294901760
        %v254 = vsub.f32 %v179, %v253
        %v255 = vand.u32 %v254, 4294901760
        %v256 = vsub.f32 %v254, %v255
        %v257 = vand.u32 %v256, 4294901760
        %258 = vmatmul.mubr.f32.gmra.mrb[0].mxu0 %v257
        %v259 = vpop.f32.mrb[0].mxu0
        %v260 = vadd.f32 0.0, %v259
        %v261 = vpop.f32.mrb[0].mxu0
        %v262 = vadd.f32 0.0, %v261
        %263 = vdwg.mxu0
        %v264 = vand.u32 %v184, 4294901760
        %v265 = vsub.f32 %v184, %v264
        %v266 = vand.u32 %v265, 4294901760
        %v267 = vsub.f32 %v265, %v266
        %v268 = vand.u32 %v267, 4294901760
        %269 = vmatprep.subr.mxu0 %v268
        %v270 = vand.u32 %v182, 4294901760
        %v271 = vsub.f32 %v182, %v270
        %v272 = vand.u32 %v271, 4294901760
        %v273 = vsub.f32 %v271, %v272
        %v274 = vand.u32 %v273, 4294901760
        %275 = vmatpush1.msra.mxu0 %v274
        %276 = vmatprep.subr.mxu0 0.0
        %277 = vmatpush1.msra.mxu0 0.0
        %278 = vmatprep.subr.mxu0 0.0
        %279 = vmatpush1.msra.mxu0 0.0
        %280 = vmatprep.subr.mxu0 0.0
        %281 = vmatpush1.msra.mxu0 0.0
        %282 = vmatprep.subr.mxu0 0.0
        %283 = vmatpush1.msra.mxu0 0.0
        %284 = vmatprep.subr.mxu0 0.0
        %285 = vmatpush1.msra.mxu0 0.0
        %286 = vmatprep.subr.mxu0 0.0
        %287 = vmatpush1.msra.mxu0 0.0
        %288 = vmatprep.subr.mxu0 0.0
        %289 = vmatpush1.msra.mxu0 0.0
        %290 = vmatprep.subr.mxu0 0.0
        %291 = vmatpush1.msra.mxu0 0.0
        %292 = vmatprep.subr.mxu0 0.0
        %293 = vmatpush1.msra.mxu0 0.0
        %294 = vmatprep.subr.mxu0 0.0
        %295 = vmatpush1.msra.mxu0 0.0
        %296 = vmatprep.subr.mxu0 0.0
        %297 = vmatpush1.msra.mxu0 0.0
        %298 = vmatprep.subr.mxu0 0.0
        %299 = vmatpush1.msra.mxu0 0.0
        %300 = vmatprep.subr.mxu0 0.0
        %301 = vmatpush1.msra.mxu0 0.0
        %302 = vmatprep.subr.mxu0 0.0
        %303 = vmatpush1.msra.mxu0 0.0
        %304 = vmatprep.subr.mxu0 0.0
        %305 = vmatpush1.msra.mxu0 0.0
        %306 = vmatprep.subr.mxu0 0.0
        %307 = vmatpush1.msra.mxu0 0.0
        %308 = vmatprep.subr.mxu0 0.0
        %309 = vmatpush1.msra.mxu0 0.0
        %310 = vmatprep.subr.mxu0 0.0
        %311 = vmatpush1.msra.mxu0 0.0
        %312 = vmatprep.subr.mxu0 0.0
        %313 = vmatpush1.msra.mxu0 0.0
        %314 = vmatprep.subr.mxu0 0.0
        %315 = vmatpush1.msra.mxu0 0.0
        %316 = vmatprep.subr.mxu0 0.0
        %317 = vmatpush1.msra.mxu0 0.0
        %318 = vmatprep.subr.mxu0 0.0
        %319 = vmatpush1.msra.mxu0 0.0
        %320 = vmatprep.subr.mxu0 0.0
        %321 = vmatpush1.msra.mxu0 0.0
        %322 = vmatprep.subr.mxu0 0.0
        %323 = vmatpush1.msra.mxu0 0.0
        %324 = vmatprep.subr.mxu0 0.0
        %325 = vmatpush1.msra.mxu0 0.0
        %326 = vmatprep.subr.mxu0 0.0
        %327 = vmatpush1.msra.mxu0 0.0
        %328 = vmatprep.subr.mxu0 0.0
        %329 = vmatpush1.msra.mxu0 0.0
        %330 = vmatprep.subr.mxu0 0.0
        %331 = vmatpush1.msra.mxu0 0.0
        %332 = vmatprep.subr.mxu0 0.0
        %333 = vmatpush1.msra.mxu0 0.0
        %334 = vmatprep.subr.mxu0 0.0
        %335 = vmatpush1.msra.mxu0 0.0
        %336 = vmatprep.subr.mxu0 0.0
        %337 = vmatpush1.msra.mxu0 0.0
        %338 = vmatprep.mubr.f32.mxu0 0.0
        %v339 = vand.u32 %v179, 4294901760
        %340 = vmatmul.mubr.f32.gmra.mrb[0].mxu0 %v339
        %v341 = vpop.f32.mrb[0].mxu0
        %v342 = vadd.f32 %v260, %v341
        %v343 = vpop.f32.mrb[0].mxu0
        %v344 = vadd.f32 %v262, %v343
        %345 = vdwg.mxu0
        %v346 = vand.u32 %v184, 4294901760
        %v347 = vsub.f32 %v184, %v346
        %348 = vmatprep.subr.mxu0 %v347
        %v349 = vand.u32 %v182, 4294901760
        %v350 = vsub.f32 %v182, %v349
        %351 = vmatpush1.msra.mxu0 %v350
        %352 = vmatprep.subr.mxu0 0.0
        %353 = vmatpush1.msra.mxu0 0.0
        %354 = vmatprep.subr.mxu0 0.0
        %355 = vmatpush1.msra.mxu0 0.0
        %356 = vmatprep.subr.mxu0 0.0
        %357 = vmatpush1.msra.mxu0 0.0
        %358 = vmatprep.subr.mxu0 0.0
        %359 = vmatpush1.msra.mxu0 0.0
        %360 = vmatprep.subr.mxu0 0.0
        %361 = vmatpush1.msra.mxu0 0.0
        %362 = vmatprep.subr.mxu0 0.0
        %363 = vmatpush1.msra.mxu0 0.0
        %364 = vmatprep.subr.mxu0 0.0
        %365 = vmatpush1.msra.mxu0 0.0
        %366 = vmatprep.subr.mxu0 0.0
        %367 = vmatpush1.msra.mxu0 0.0
        %368 = vmatprep.subr.mxu0 0.0
        %369 = vmatpush1.msra.mxu0 0.0
        %370 = vmatprep.subr.mxu0 0.0
        %371 = vmatpush1.msra.mxu0 0.0
        %372 = vmatprep.subr.mxu0 0.0
        %373 = vmatpush1.msra.mxu0 0.0
        %374 = vmatprep.subr.mxu0 0.0
        %375 = vmatpush1.msra.mxu0 0.0
        %376 = vmatprep.subr.mxu0 0.0
        %377 = vmatpush1.msra.mxu0 0.0
        %378 = vmatprep.subr.mxu0 0.0
        %379 = vmatpush1.msra.mxu0 0.0
        %380 = vmatprep.subr.mxu0 0.0
        %381 = vmatpush1.msra.mxu0 0.0
        %382 = vmatprep.subr.mxu0 0.0
        %383 = vmatpush1.msra.mxu0 0.0
        %384 = vmatprep.subr.mxu0 0.0
        %385 = vmatpush1.msra.mxu0 0.0
        %386 = vmatprep.subr.mxu0 0.0
        %387 = vmatpush1.msra.mxu0 0.0
        %388 = vmatprep.subr.mxu0 0.0
        %389 = vmatpush1.msra.mxu0 0.0
        %390 = vmatprep.subr.mxu0 0.0
        %391 = vmatpush1.msra.mxu0 0.0
        %392 = vmatprep.subr.mxu0 0.0
        %393 = vmatpush1.msra.mxu0 0.0
        %394 = vmatprep.subr.mxu0 0.0
        %395 = vmatpush1.msra.mxu0 0.0
        %396 = vmatprep.subr.mxu0 0.0
        %397 = vmatpush1.msra.mxu0 0.0
        %398 = vmatprep.subr.mxu0 0.0
        %399 = vmatpush1.msra.mxu0 0.0
        %400 = vmatprep.subr.mxu0 0.0
        %401 = vmatpush1.msra.mxu0 0.0
        %402 = vmatprep.subr.mxu0 0.0
        %403 = vmatpush1.msra.mxu0 0.0
        %404 = vmatprep.subr.mxu0 0.0
        %405 = vmatpush1.msra.mxu0 0.0
        %406 = vmatprep.subr.mxu0 0.0
        %407 = vmatpush1.msra.mxu0 0.0
        %408 = vmatprep.subr.mxu0 0.0
        %409 = vmatpush1.msra.mxu0 0.0
        %410 = vmatprep.subr.mxu0 0.0
        %411 = vmatpush1.msra.mxu0 0.0
        %412 = vmatprep.subr.mxu0 0.0
        %413 = vmatpush1.msra.mxu0 0.0
        %414 = vmatprep.mubr.f32.mxu0 0.0
        %v415 = vand.u32 %v179, 4294901760
        %v416 = vsub.f32 %v179, %v415
        %417 = vmatmul.mubr.f32.gmra.mrb[0].mxu0 %v416
        %v418 = vpop.f32.mrb[0].mxu0
        %v419 = vadd.f32 %v342, %v418
        %v420 = vpop.f32.mrb[0].mxu0
        %v421 = vadd.f32 %v344, %v420
        %422 = vdwg.mxu0
        %v423 = vand.u32 %v184, 4294901760
        %424 = vmatprep.subr.mxu0 %v423
        %v425 = vand.u32 %v182, 4294901760
        %426 = vmatpush1.msra.mxu0 %v425
        %427 = vmatprep.subr.mxu0 0.0
        %428 = vmatpush1.msra.mxu0 0.0
        %429 = vmatprep.subr.mxu0 0.0
        %430 = vmatpush1.msra.mxu0 0.0
        %431 = vmatprep.subr.mxu0 0.0
        %432 = vmatpush1.msra.mxu0 0.0
        %433 = vmatprep.subr.mxu0 0.0
        %434 = vmatpush1.msra.mxu0 0.0
        %435 = vmatprep.subr.mxu0 0.0
        %436 = vmatpush1.msra.mxu0 0.0
        %437 = vmatprep.subr.mxu0 0.0
        %438 = vmatpush1.msra.mxu0 0.0
        %439 = vmatprep.subr.mxu0 0.0
        %440 = vmatpush1.msra.mxu0 0.0
        %441 = vmatprep.subr.mxu0 0.0
        %442 = vmatpush1.msra.mxu0 0.0
        %443 = vmatprep.subr.mxu0 0.0
        %444 = vmatpush1.msra.mxu0 0.0
        %445 = vmatprep.subr.mxu0 0.0
        %446 = vmatpush1.msra.mxu0 0.0
        %447 = vmatprep.subr.mxu0 0.0
        %448 = vmatpush1.msra.mxu0 0.0
        %449 = vmatprep.subr.mxu0 0.0
        %450 = vmatpush1.msra.mxu0 0.0
        %451 = vmatprep.subr.mxu0 0.0
        %452 = vmatpush1.msra.mxu0 0.0
        %453 = vmatprep.subr.mxu0 0.0
        %454 = vmatpush1.msra.mxu0 0.0
        %455 = vmatprep.subr.mxu0 0.0
        %456 = vmatpush1.msra.mxu0 0.0
        %457 = vmatprep.subr.mxu0 0.0
        %458 = vmatpush1.msra.mxu0 0.0
        %459 = vmatprep.subr.mxu0 0.0
        %460 = vmatpush1.msra.mxu0 0.0
        %461 = vmatprep.subr.mxu0 0.0
        %462 = vmatpush1.msra.mxu0 0.0
        %463 = vmatprep.subr.mxu0 0.0
        %464 = vmatpush1.msra.mxu0 0.0
        %465 = vmatprep.subr.mxu0 0.0
        %466 = vmatpush1.msra.mxu0 0.0
        %467 = vmatprep.subr.mxu0 0.0
        %468 = vmatpush1.msra.mxu0 0.0
        %469 = vmatprep.subr.mxu0 0.0
        %470 = vmatpush1.msra.mxu0 0.0
        %471 = vmatprep.subr.mxu0 0.0
        %472 = vmatpush1.msra.mxu0 0.0
        %473 = vmatprep.subr.mxu0 0.0
        %474 = vmatpush1.msra.mxu0 0.0
        %475 = vmatprep.subr.mxu0 0.0
        %476 = vmatpush1.msra.mxu0 0.0
        %477 = vmatprep.subr.mxu0 0.0
        %478 = vmatpush1.msra.mxu0 0.0
        %479 = vmatprep.subr.mxu0 0.0
        %480 = vmatpush1.msra.mxu0 0.0
        %481 = vmatprep.subr.mxu0 0.0
        %482 = vmatpush1.msra.mxu0 0.0
        %483 = vmatprep.subr.mxu0 0.0
        %484 = vmatpush1.msra.mxu0 0.0
        %485 = vmatprep.subr.mxu0 0.0
        %486 = vmatpush1.msra.mxu0 0.0
        %487 = vmatprep.subr.mxu0 0.0
        %488 = vmatpush1.msra.mxu0 0.0
        %489 = vmatprep.mubr.f32.mxu0 0.0
        %v490 = vand.u32 %v179, 4294901760
        %v491 = vsub.f32 %v179, %v490
        %v492 = vand.u32 %v491, 4294901760
        %493 = vmatmul.mubr.f32.gmra.mrb[0].mxu0 %v492
        %v494 = vpop.f32.mrb[0].mxu0
        %v495 = vadd.f32 %v419, %v494
        %v496 = vpop.f32.mrb[0].mxu0
        %v497 = vadd.f32 %v421, %v496
        %498 = vdwg.mxu0
        %v499 = vand.u32 %v184, 4294901760
        %v500 = vsub.f32 %v184, %v499
        %v501 = vand.u32 %v500, 4294901760
        %502 = vmatprep.subr.mxu0 %v501
        %v503 = vand.u32 %v182, 4294901760
        %v504 = vsub.f32 %v182, %v503
        %v505 = vand.u32 %v504, 4294901760
        %506 = vmatpush1.msra.mxu0 %v505
        %507 = vmatprep.subr.mxu0 0.0
        %508 = vmatpush1.msra.mxu0 0.0
        %509 = vmatprep.subr.mxu0 0.0
        %510 = vmatpush1.msra.mxu0 0.0
        %511 = vmatprep.subr.mxu0 0.0
        %512 = vmatpush1.msra.mxu0 0.0
        %513 = vmatprep.subr.mxu0 0.0
        %514 = vmatpush1.msra.mxu0 0.0
        %515 = vmatprep.subr.mxu0 0.0
        %516 = vmatpush1.msra.mxu0 0.0
        %517 = vmatprep.subr.mxu0 0.0
        %518 = vmatpush1.msra.mxu0 0.0
        %519 = vmatprep.subr.mxu0 0.0
        %520 = vmatpush1.msra.mxu0 0.0
        %521 = vmatprep.subr.mxu0 0.0
        %522 = vmatpush1.msra.mxu0 0.0
        %523 = vmatprep.subr.mxu0 0.0
        %524 = vmatpush1.msra.mxu0 0.0
        %525 = vmatprep.subr.mxu0 0.0
        %526 = vmatpush1.msra.mxu0 0.0
        %527 = vmatprep.subr.mxu0 0.0
        %528 = vmatpush1.msra.mxu0 0.0
        %529 = vmatprep.subr.mxu0 0.0
        %530 = vmatpush1.msra.mxu0 0.0
        %531 = vmatprep.subr.mxu0 0.0
        %532 = vmatpush1.msra.mxu0 0.0
        %533 = vmatprep.subr.mxu0 0.0
        %534 = vmatpush1.msra.mxu0 0.0
        %535 = vmatprep.subr.mxu0 0.0
        %536 = vmatpush1.msra.mxu0 0.0
        %537 = vmatprep.subr.mxu0 0.0
        %538 = vmatpush1.msra.mxu0 0.0
        %539 = vmatprep.subr.mxu0 0.0
        %540 = vmatpush1.msra.mxu0 0.0
        %541 = vmatprep.subr.mxu0 0.0
        %542 = vmatpush1.msra.mxu0 0.0
        %543 = vmatprep.subr.mxu0 0.0
        %544 = vmatpush1.msra.mxu0 0.0
        %545 = vmatprep.subr.mxu0 0.0
        %546 = vmatpush1.msra.mxu0 0.0
        %547 = vmatprep.subr.mxu0 0.0
        %548 = vmatpush1.msra.mxu0 0.0
        %549 = vmatprep.subr.mxu0 0.0
        %550 = vmatpush1.msra.mxu0 0.0
        %551 = vmatprep.subr.mxu0 0.0
        %552 = vmatpush1.msra.mxu0 0.0
        %553 = vmatprep.subr.mxu0 0.0
        %554 = vmatpush1.msra.mxu0 0.0
        %555 = vmatprep.subr.mxu0 0.0
        %556 = vmatpush1.msra.mxu0 0.0
        %557 = vmatprep.subr.mxu0 0.0
        %558 = vmatpush1.msra.mxu0 0.0
        %559 = vmatprep.subr.mxu0 0.0
        %560 = vmatpush1.msra.mxu0 0.0
        %561 = vmatprep.subr.mxu0 0.0
        %562 = vmatpush1.msra.mxu0 0.0
        %563 = vmatprep.subr.mxu0 0.0
        %564 = vmatpush1.msra.mxu0 0.0
        %565 = vmatprep.subr.mxu0 0.0
        %566 = vmatpush1.msra.mxu0 0.0
        %567 = vmatprep.subr.mxu0 0.0
        %568 = vmatpush1.msra.mxu0 0.0
        %569 = vmatprep.mubr.f32.mxu0 0.0
        %v570 = vand.u32 %v179, 4294901760
        %571 = vmatmul.mubr.f32.gmra.mrb[0].mxu0 %v570
        %v572 = vpop.f32.mrb[0].mxu0
        %v573 = vadd.f32 %v495, %v572
        %v574 = vpop.f32.mrb[0].mxu0
        %v575 = vadd.f32 %v497, %v574
        %576 = vdwg.mxu0
        %v577 = vand.u32 %v184, 4294901760
        %578 = vmatprep.subr.mxu0 %v577
        %v579 = vand.u32 %v182, 4294901760
        %580 = vmatpush1.msra.mxu0 %v579
        %581 = vmatprep.subr.mxu0 0.0
        %582 = vmatpush1.msra.mxu0 0.0
        %583 = vmatprep.subr.mxu0 0.0
        %584 = vmatpush1.msra.mxu0 0.0
        %585 = vmatprep.subr.mxu0 0.0
        %586 = vmatpush1.msra.mxu0 0.0
        %587 = vmatprep.subr.mxu0 0.0
        %588 = vmatpush1.msra.mxu0 0.0
        %589 = vmatprep.subr.mxu0 0.0
        %590 = vmatpush1.msra.mxu0 0.0
        %591 = vmatprep.subr.mxu0 0.0
        %592 = vmatpush1.msra.mxu0 0.0
        %593 = vmatprep.subr.mxu0 0.0
        %594 = vmatpush1.msra.mxu0 0.0
        %595 = vmatprep.subr.mxu0 0.0
        %596 = vmatpush1.msra.mxu0 0.0
        %597 = vmatprep.subr.mxu0 0.0
        %598 = vmatpush1.msra.mxu0 0.0
        %599 = vmatprep.subr.mxu0 0.0
        %600 = vmatpush1.msra.mxu0 0.0
        %601 = vmatprep.subr.mxu0 0.0
        %602 = vmatpush1.msra.mxu0 0.0
        %603 = vmatprep.subr.mxu0 0.0
        %604 = vmatpush1.msra.mxu0 0.0
        %605 = vmatprep.subr.mxu0 0.0
        %606 = vmatpush1.msra.mxu0 0.0
        %607 = vmatprep.subr.mxu0 0.0
        %608 = vmatpush1.msra.mxu0 0.0
        %609 = vmatprep.subr.mxu0 0.0
        %610 = vmatpush1.msra.mxu0 0.0
        %611 = vmatprep.subr.mxu0 0.0
        %612 = vmatpush1.msra.mxu0 0.0
        %613 = vmatprep.subr.mxu0 0.0
        %614 = vmatpush1.msra.mxu0 0.0
        %615 = vmatprep.subr.mxu0 0.0
        %616 = vmatpush1.msra.mxu0 0.0
        %617 = vmatprep.subr.mxu0 0.0
        %618 = vmatpush1.msra.mxu0 0.0
        %619 = vmatprep.subr.mxu0 0.0
        %620 = vmatpush1.msra.mxu0 0.0
        %621 = vmatprep.subr.mxu0 0.0
        %622 = vmatpush1.msra.mxu0 0.0
        %623 = vmatprep.subr.mxu0 0.0
        %624 = vmatpush1.msra.mxu0 0.0
        %625 = vmatprep.subr.mxu0 0.0
        %626 = vmatpush1.msra.mxu0 0.0
        %627 = vmatprep.subr.mxu0 0.0
        %628 = vmatpush1.msra.mxu0 0.0
        %629 = vmatprep.subr.mxu0 0.0
        %630 = vmatpush1.msra.mxu0 0.0
        %631 = vmatprep.subr.mxu0 0.0
        %632 = vmatpush1.msra.mxu0 0.0
        %633 = vmatprep.subr.mxu0 0.0
        %634 = vmatpush1.msra.mxu0 0.0
        %635 = vmatprep.subr.mxu0 0.0
        %636 = vmatpush1.msra.mxu0 0.0
        %637 = vmatprep.subr.mxu0 0.0
        %638 = vmatpush1.msra.mxu0 0.0
        %639 = vmatprep.subr.mxu0 0.0
        %640 = vmatpush1.msra.mxu0 0.0
        %641 = vmatprep.subr.mxu0 0.0
        %642 = vmatpush1.msra.mxu0 0.0
        %643 = vmatprep.mubr.f32.mxu0 0.0
        %v644 = vand.u32 %v179, 4294901760
        %645 = vmatmul.mubr.f32.gmra.mrb[0].mxu0 %v644
        %v646 = vpop.f32.mrb[0].mxu0
        %v647 = vadd.f32 %v573, %v646
        %v648 = vpop.f32.mrb[0].mxu0
        %v649 = vadd.f32 %v575, %v648
        %650 = vdwg.mxu0
        %v653 = vcombine.low %v647, %v649
        %655 = vst [vmem:[%s172] sm:$0xff] %v653
        %s656 = sand.u32 %s75, 1
        %s657 = scalar_lea.sflag [#allocation4], %s656
        %s658 = sand.u32 %s75, 1
        %s659 = smul.addr %s658, 8
        %s660 = scalar_lea.vmem [#allocation7], %s659
        // Predicated region
        $region37: #{tpu_custom_call.1} parent=27 // pred_check
          %p661 = pneg %p85
        $region38: #{tpu_custom_call.1} parent=27 // pred_check_branch
          %663 = sbr.rel (%p661) target = $region40
        $region39: #{tpu_custom_call.1} parent=27 // pred_region
          %s665 = ssub.s32 128, 128
          %666 = vsyncadd %s657, %s665
          %s667 = smul.addr %s20, 2
          %s668 = smul.addr %s667, 64
          %s669 = scalar_lea.hbm %s2, %s668
          %s671 = sshll.u32 %s660, 4
          %s672 = int_to_ptr.vmem [resolvable:$true] %s671
          %674 = dma.vmem_to_hbm [thread:$0]  %s672, 128, %s669, %s657
        $region40: #{tpu_custom_call.1} parent=27 // pred_fallthru
          _
      $region28: #{tpu_custom_call.1} parent=5 // pred_fallthru
        _
      %p675 = scmp.le.s32.totalorder 2, %s15
      // Predicated region
      $region41: #{tpu_custom_call.1} parent=5 // pred_check
        %p676 = pneg %p675
      $region42: #{tpu_custom_call.1} parent=5 // pred_check_branch
        %678 = sbr.rel (%p676) target = $region44
      $region43: #{tpu_custom_call.1} parent=5 // pred_region
        %s679 = ssub.s32 %s15, 2
        // Predicated region
        $region45: #{tpu_custom_call.1} parent=43 // pred_check
          %p680 = pneg %p91
        $region46: #{tpu_custom_call.1} parent=43 // pred_check_branch
          %682 = sbr.rel (%p680) target = $region48
        $region47: #{tpu_custom_call.1} parent=43 // pred_region
          %s683 = sand.u32 %s76, 1
          %s684 = scalar_lea.sflag [#allocation4], %s683
          %s685 = sand.u32 %s76, 1
          %s686 = smul.addr %s685, 8
          %s687 = scalar_lea.vmem [#allocation7], %s686
          %688 = dma.done %s684, 128
        $region48: #{tpu_custom_call.1} parent=43 // pred_fallthru
          _
      $region44: #{tpu_custom_call.1} parent=5 // pred_fallthru
        _
    $region6: #{tpu_custom_call.1} parent=1 // loop_footer
      %s19 = sadd.s32 1, %s15
    $region7: #{tpu_custom_call.1} parent=1 // loop_footer_branch
      %14 = sbr.rel target = $region3
    $region8: #{tpu_custom_call.1} parent=1 // loop_exit
      _
    %689 = vsyncpa [#allocation3], 1
    %s690 = scalar_lea.sflag [#allocation3], 1
    %691 = vsyncpa %s690, 1
    %692 = vsyncpa [#allocation6], 1
    %693 = vsyncpa [#allocation4], 1
    %s694 = scalar_lea.sflag [#allocation4], 1
    %695 = vsyncpa %s694, 1

</llo_original>
